<compile_context>
chip_gen: v5e
topology: v5e:2x2
jax: 0.10.0
libtpu: 0.0.40
codegen_flags: <defaults>
</compile_context>

<pallas_src>
import jax
import jax.numpy as jnp
from jax import lax
from jax.experimental import pallas as pl
from jax.experimental.pallas import tpu as pltpu

# ------------------------- small config (consistent with the module) -------------------------
B = 2                 # batch
S = 8                 # sequence length
E = 32                # embed_dim == ffn_dim
NH = 4                # num_heads
HD = E // NH          # head_dim = 8
D_OUT = 64            # outer_dim (fc1 input / fc2 output / final LayerNorm dim)
BS = B * S
SCALE = HD ** -0.5
LN_EPS = 1e-5         # torch.nn.LayerNorm default
BIG_NEG = -1e9        # additive mask value (cross-batch / padding)


# ------------------------- in-kernel helpers -------------------------
def _layer_norm(x, g, b):
    mean = jnp.mean(x, axis=-1, keepdims=True)
    var = jnp.mean(jnp.square(x - mean), axis=-1, keepdims=True)
    return (x - mean) * lax.rsqrt(var + LN_EPS) * g + b


def _gelu_exact(x):
    # Exact (erf) GELU matching torch ACT2FN['gelu'].  erf via Abramowitz&Stegun 7.1.26
    # (|abs err| <= 1.5e-7): only exp/mul/add/div/where needed (safe Mosaic lowering).
    z = x * 0.7071067811865476            # x / sqrt(2)
    az = jnp.where(z >= 0.0, z, -z)
    t = 1.0 / (1.0 + 0.3275911 * az)
    poly = ((((1.061405429 * t - 1.453152027) * t + 1.421413741) * t
             - 0.284496736) * t + 0.254829592) * t
    erf_abs = 1.0 - poly * jnp.exp(-az * az)
    erf = jnp.where(z >= 0.0, erf_abs, -erf_abs)
    return 0.5 * x * (1.0 + erf)


# ------------------------- the single fused kernel -------------------------
def _plugin_kernel(x_ref, mask_ref, lhm_ref,
                   w1_ref, wqkv_ref, bqkv_ref, wo_ref, w2_ref,
                   be_ref, bout_ref, out_ref):
    x = x_ref[...]                        # [BS, D_OUT]   hidden_pos_states (flattened batch)
    be = be_ref[...]                      # [4, E]        b1, bo(out_proj), ln1_g, ln1_b
    bo = bout_ref[...]                    # [3, D_OUT]    b2, ln2_g, ln2_b

    # fc1 + exact GELU (activation_dropout is identity in eval mode)
    h = jnp.dot(x, w1_ref[...], preferred_element_type=jnp.float32) + be[0:1, :]
    h = _gelu_exact(h)
    residual = h                          # [BS, E]

    # Fused QKV projection on the full [BS, E] slab (SCALE pre-folded into Q cols/bias at init).
    qkv = jnp.dot(h, wqkv_ref[...], preferred_element_type=jnp.float32) + bqkv_ref[...]  # [BS, 3E]

    # Block-diagonal additive attention bias, built in-kernel from the raw [B,1,S,S] mask.
    # Cross-batch entries get BIG_NEG so the full-slab softmax == per-batch softmax exactly.
    m_all = mask_ref[...]                 # [B, 1, S, S]
    neg = jnp.full((S, S), BIG_NEG, jnp.float32)
    rows = []
    for bi in range(B):                   # static tiny loops (B = 2)
        cols = [m_all[bi, 0] if bj == bi else neg for bj in range(B)]
        rows.append(jnp.concatenate(cols, axis=1))
    bias = jnp.concatenate(rows, axis=0)  # [BS, BS]

    # Multi-head attention.  layer_head_mask folded into V (scalar per head, from SMEM);
    # head contexts are concatenated and hit the out-projection with ONE matmul.
    ctx_list = []
    for hd in range(NH):                  # static, NH = 4
        lo = hd * HD
        qh = qkv[:, lo:lo + HD]                               # [BS, HD]
        kh = qkv[:, E + lo:E + lo + HD]                       # [BS, HD]
        vh = qkv[:, 2 * E + lo:2 * E + lo + HD] * lhm_ref[hd]  # [BS, HD] * per-head scalar mask
        sc = lax.dot_general(qh, kh, (((1,), (1,)), ((), ())),
                             preferred_element_type=jnp.float32) + bias   # [BS, BS]
        sc = sc - jnp.max(sc, axis=-1, keepdims=True)
        p = jnp.exp(sc)
        p = p / jnp.sum(p, axis=-1, keepdims=True)            # exact softmax (review: no approx recip)
        ctx_list.append(jnp.dot(p, vh, preferred_element_type=jnp.float32))   # [BS, HD]
    ctx_all = jnp.concatenate(ctx_list, axis=-1)               # [BS, E]
    attn = jnp.dot(ctx_all, wo_ref[...],
                   preferred_element_type=jnp.float32) + be[1:2, :]   # out_proj (+ bias)

    # residual + LayerNorm(embed_dim), fc2, LayerNorm(outer_dim)   (dropouts = identity)
    y = _layer_norm(residual + attn, be[2:3, :], be[3:4, :])
    z = jnp.dot(y, w2_ref[...], preferred_element_type=jnp.float32) + bo[0:1, :]
    out_ref[...] = _layer_norm(z, bo[1:2, :], bo[2:3, :])


# ------------------------- wrapper -------------------------
_VMEM = pl.BlockSpec(memory_space=pltpu.MemorySpace.VMEM)
_SMEM = pl.BlockSpec(memory_space=pltpu.MemorySpace.SMEM)


def plugin_forward(packed, hidden_pos_states, attention_mask, layer_head_mask):
    """hidden_pos_states [B,S,D_OUT], attention_mask [B,1,S,S] (additive), layer_head_mask [NH]."""
    x2 = hidden_pos_states.astype(jnp.float32).reshape(BS, D_OUT)   # free bitcast reshape
    out2 = pl.pallas_call(
        _plugin_kernel,
        out_shape=jax.ShapeDtypeStruct((BS, D_OUT), jnp.float32),
        in_specs=[_VMEM, _VMEM, _SMEM,          # x, mask, layer_head_mask (SMEM scalars)
                  _VMEM, _VMEM, _VMEM, _VMEM, _VMEM,   # w1, wqkv, bqkv, wo, w2
                  _VMEM, _VMEM],                # be, bout
        out_specs=_VMEM,
    )(x2,
      attention_mask.astype(jnp.float32),
      layer_head_mask.astype(jnp.float32),
      packed["w1"], packed["wqkv"], packed["bqkv"], packed["wo"], packed["w2"],
      packed["be"], packed["bout"])
    return out2.reshape(B, S, D_OUT)


# ------------------------- parameters -------------------------
def init_params(key):
    ks = jax.random.split(key, 12)

    def nrm(k, shape):
        return (0.02 * jax.random.normal(k, shape)).astype(jnp.float32)

    zeros = lambda *s: jnp.zeros(s, jnp.float32)
    ones = lambda *s: jnp.ones(s, jnp.float32)
    return {
        # weights stored as [in, out] (= transpose of torch nn.Linear.weight)
        "w1": nrm(ks[0], (D_OUT, E)), "b1": nrm(ks[1], (E,)),
        "wq": nrm(ks[2], (E, E)), "bq": nrm(ks[3], (E,)),
        "wk": nrm(ks[4], (E, E)), "bk": nrm(ks[5], (E,)),
        "wv": nrm(ks[6], (E, E)), "bv": nrm(ks[7], (E,)),
        "wo": nrm(ks[8], (E, E)), "bo": nrm(ks[9], (E,)),
        "ln1_g": ones(E), "ln1_b": zeros(E),
        "w2": nrm(ks[10], (E, D_OUT)), "b2": nrm(ks[11], (D_OUT,)),
        "ln2_g": ones(D_OUT), "ln2_b": zeros(D_OUT),
    }


def pack_params(p):
    """One-time (init-time) operand packing: fused QKV slab, scale fold, stacked bias slabs."""
    wqkv = jnp.concatenate([p["wq"] * SCALE, p["wk"], p["wv"]], axis=1)          # [E, 3E]
    bqkv = jnp.concatenate([p["bq"] * SCALE, p["bk"], p["bv"]])[None, :]         # [1, 3E]
    be = jnp.stack([p["b1"], p["bo"], p["ln1_g"], p["ln1_b"]], axis=0)           # [4, E]
    bout = jnp.stack([p["b2"], p["ln2_g"], p["ln2_b"]], axis=0)                  # [3, D_OUT]
    return {"w1": p["w1"], "wqkv": wqkv, "bqkv": bqkv, "wo": p["wo"], "w2": p["w2"],
            "be": be, "bout": bout}


if __name__ == "__main__":
    key = jax.random.PRNGKey(0)
    pkey, dkey = jax.random.split(key)
    packed = pack_params(init_params(pkey))      # packing happens ONCE, off the hot path

    k1, k2 = jax.random.split(dkey)
    hidden_pos_states = jax.random.normal(k1, (B, S, D_OUT), dtype=jnp.float32)
    # additive padding mask [B, 1, S, S]: last two key positions of batch 1 masked out
    valid = jnp.ones((B, S), jnp.float32).at[1, S - 2:].set(0.0)
    attention_mask = jnp.broadcast_to(
        jnp.where(valid[:, None, None, :] > 0, 0.0, BIG_NEG), (B, 1, S, S)).astype(jnp.float32)
    layer_head_mask = jax.random.uniform(k2, (NH,), minval=0.5, maxval=1.0).astype(jnp.float32)

    fwd = jax.jit(plugin_forward)
    out = fwd(packed, hidden_pos_states, attention_mask, layer_head_mask)
    jax.block_until_ready(out)
    assert out.shape == (B, S, D_OUT) and out.dtype == jnp.float32
    assert bool(jnp.all(jnp.isfinite(out)))
    print("KERNEL_OK")
</pallas_src>

<mosaic_0001>
module attributes {stable_mosaic.version = 11 : i64} {
  func.func @_plugin_kernel(%arg0: memref<16x64xf32, #tpu.memory_space<vmem>>, %arg1: memref<2x1x8x8xf32, #tpu.memory_space<vmem>>, %arg2: memref<4xf32, #tpu.memory_space<smem>>, %arg3: memref<64x32xf32, #tpu.memory_space<vmem>>, %arg4: memref<32x96xf32, #tpu.memory_space<vmem>>, %arg5: memref<1x96xf32, #tpu.memory_space<vmem>>, %arg6: memref<32x32xf32, #tpu.memory_space<vmem>>, %arg7: memref<32x64xf32, #tpu.memory_space<vmem>>, %arg8: memref<4x32xf32, #tpu.memory_space<vmem>>, %arg9: memref<3x64xf32, #tpu.memory_space<vmem>>, %arg10: memref<16x64xf32, #tpu.memory_space<vmem>>) attributes {dimension_semantics = [], scalar_prefetch = 0 : i64, scratch_operands = 0 : i64, tpu.core_type = #tpu.core_type<tc>} {
    %c0 = arith.constant 0 : index
    %c0_0 = arith.constant 0 : index
    %0 = vector.load %arg0[%c0, %c0_0] : memref<16x64xf32, #tpu.memory_space<vmem>>, vector<16x64xf32>
    %c0_1 = arith.constant 0 : index
    %c0_2 = arith.constant 0 : index
    %1 = vector.load %arg8[%c0_1, %c0_2] : memref<4x32xf32, #tpu.memory_space<vmem>>, vector<4x32xf32>
    %c0_3 = arith.constant 0 : index
    %c0_4 = arith.constant 0 : index
    %2 = vector.load %arg9[%c0_3, %c0_4] : memref<3x64xf32, #tpu.memory_space<vmem>>, vector<3x64xf32>
    %c0_5 = arith.constant 0 : index
    %c0_6 = arith.constant 0 : index
    %3 = vector.load %arg3[%c0_5, %c0_6] : memref<64x32xf32, #tpu.memory_space<vmem>>, vector<64x32xf32>
    %cst = arith.constant dense<0.000000e+00> : vector<16x32xf32>
    %4 = tpu.matmul %0, %3, %cst {dimension_numbers = #tpu.dot_dimension_numbers<[1], [0], [0], [1], [0, 0, 1, 1], [], []>} : vector<16x64xf32>, vector<64x32xf32>, vector<16x32xf32> -> vector<16x32xf32>
    %5 = vector.extract_strided_slice %1 {offsets = [0, 0], sizes = [1, 32], strides = [1, 1]} : vector<4x32xf32> to vector<1x32xf32>
    %6 = vector.broadcast %5 : vector<1x32xf32> to vector<16x32xf32>
    %7 = arith.addf %4, %6 : vector<16x32xf32>
    %cst_7 = arith.constant 0.707106769 : f32
    %8 = vector.broadcast %cst_7 : f32 to vector<16x32xf32>
    %9 = arith.mulf %7, %8 : vector<16x32xf32>
    %cst_8 = arith.constant 0.000000e+00 : f32
    %10 = vector.broadcast %cst_8 : f32 to vector<16x32xf32>
    %11 = arith.cmpf oge, %9, %10 : vector<16x32xf32>
    %cst_9 = arith.constant 0.000000e+00 : f32
    %12 = vector.broadcast %cst_9 : f32 to vector<16x32xf32>
    %13 = arith.subf %12, %9 : vector<16x32xf32>
    %14 = arith.select %11, %9, %13 : vector<16x32xi1>, vector<16x32xf32>
    %cst_10 = arith.constant 0.327591091 : f32
    %15 = vector.broadcast %cst_10 : f32 to vector<16x32xf32>
    %16 = arith.mulf %15, %14 : vector<16x32xf32>
    %cst_11 = arith.constant 1.000000e+00 : f32
    %17 = vector.broadcast %cst_11 : f32 to vector<16x32xf32>
    %18 = arith.addf %17, %16 : vector<16x32xf32>
    %cst_12 = arith.constant 1.000000e+00 : f32
    %19 = vector.broadcast %cst_12 : f32 to vector<16x32xf32>
    %20 = arith.divf %19, %18 : vector<16x32xf32>
    %cst_13 = arith.constant 1.06140542 : f32
    %21 = vector.broadcast %cst_13 : f32 to vector<16x32xf32>
    %22 = arith.mulf %21, %20 : vector<16x32xf32>
    %cst_14 = arith.constant 1.45315206 : f32
    %23 = vector.broadcast %cst_14 : f32 to vector<16x32xf32>
    %24 = arith.subf %22, %23 : vector<16x32xf32>
    %25 = arith.mulf %24, %20 : vector<16x32xf32>
    %cst_15 = arith.constant 1.42141378 : f32
    %26 = vector.broadcast %cst_15 : f32 to vector<16x32xf32>
    %27 = arith.addf %25, %26 : vector<16x32xf32>
    %28 = arith.mulf %27, %20 : vector<16x32xf32>
    %cst_16 = arith.constant 0.284496725 : f32
    %29 = vector.broadcast %cst_16 : f32 to vector<16x32xf32>
    %30 = arith.subf %28, %29 : vector<16x32xf32>
    %31 = arith.mulf %30, %20 : vector<16x32xf32>
    %cst_17 = arith.constant 0.254829586 : f32
    %32 = vector.broadcast %cst_17 : f32 to vector<16x32xf32>
    %33 = arith.addf %31, %32 : vector<16x32xf32>
    %34 = arith.mulf %33, %20 : vector<16x32xf32>
    %cst_18 = arith.constant 0.000000e+00 : f32
    %35 = vector.broadcast %cst_18 : f32 to vector<16x32xf32>
    %36 = arith.subf %35, %14 : vector<16x32xf32>
    %37 = arith.mulf %36, %14 : vector<16x32xf32>
    %38 = math.exp %37 : vector<16x32xf32>
    %39 = arith.mulf %34, %38 : vector<16x32xf32>
    %cst_19 = arith.constant 1.000000e+00 : f32
    %40 = vector.broadcast %cst_19 : f32 to vector<16x32xf32>
    %41 = arith.subf %40, %39 : vector<16x32xf32>
    %cst_20 = arith.constant 0.000000e+00 : f32
    %42 = vector.broadcast %cst_20 : f32 to vector<16x32xf32>
    %43 = arith.cmpf oge, %9, %42 : vector<16x32xf32>
    %cst_21 = arith.constant 0.000000e+00 : f32
    %44 = vector.broadcast %cst_21 : f32 to vector<16x32xf32>
    %45 = arith.subf %44, %41 : vector<16x32xf32>
    %46 = arith.select %43, %41, %45 : vector<16x32xi1>, vector<16x32xf32>
    %cst_22 = arith.constant 5.000000e-01 : f32
    %47 = vector.broadcast %cst_22 : f32 to vector<16x32xf32>
    %48 = arith.mulf %47, %7 : vector<16x32xf32>
    %cst_23 = arith.constant 1.000000e+00 : f32
    %49 = vector.broadcast %cst_23 : f32 to vector<16x32xf32>
    %50 = arith.addf %49, %46 : vector<16x32xf32>
    %51 = arith.mulf %48, %50 : vector<16x32xf32>
    %c0_24 = arith.constant 0 : index
    %c0_25 = arith.constant 0 : index
    %52 = vector.load %arg4[%c0_24, %c0_25] : memref<32x96xf32, #tpu.memory_space<vmem>>, vector<32x96xf32>
    %cst_26 = arith.constant dense<0.000000e+00> : vector<16x96xf32>
    %53 = tpu.matmul %51, %52, %cst_26 {dimension_numbers = #tpu.dot_dimension_numbers<[1], [0], [0], [1], [0, 0, 1, 1], [], []>} : vector<16x32xf32>, vector<32x96xf32>, vector<16x96xf32> -> vector<16x96xf32>
    %c0_27 = arith.constant 0 : index
    %c0_28 = arith.constant 0 : index
    %54 = vector.load %arg5[%c0_27, %c0_28] : memref<1x96xf32, #tpu.memory_space<vmem>>, vector<1x96xf32>
    %55 = vector.broadcast %54 : vector<1x96xf32> to vector<16x96xf32>
    %56 = arith.addf %53, %55 : vector<16x96xf32>
    %c0_29 = arith.constant 0 : index
    %c0_30 = arith.constant 0 : index
    %c0_31 = arith.constant 0 : index
    %c0_32 = arith.constant 0 : index
    %57 = vector.load %arg1[%c0_29, %c0_30, %c0_31, %c0_32] : memref<2x1x8x8xf32, #tpu.memory_space<vmem>>, vector<2x1x8x8xf32>
    %cst_33 = arith.constant -1.000000e+09 : f32
    %58 = vector.broadcast %cst_33 : f32 to vector<8x8xf32>
    %59 = vector.extract_strided_slice %57 {offsets = [0, 0, 0, 0], sizes = [1, 1, 8, 8], strides = [1, 1, 1, 1]} : vector<2x1x8x8xf32> to vector<1x1x8x8xf32>
    %60 = vector.shape_cast %59 : vector<1x1x8x8xf32> to vector<8x8xf32>
    %61 = tpu.concatenate %60, %58 in 1 : vector<8x8xf32>, vector<8x8xf32> -> vector<8x16xf32>
    %62 = vector.extract_strided_slice %57 {offsets = [1, 0, 0, 0], sizes = [1, 1, 8, 8], strides = [1, 1, 1, 1]} : vector<2x1x8x8xf32> to vector<1x1x8x8xf32>
    %63 = vector.shape_cast %62 : vector<1x1x8x8xf32> to vector<8x8xf32>
    %64 = tpu.concatenate %58, %63 in 1 : vector<8x8xf32>, vector<8x8xf32> -> vector<8x16xf32>
    %65 = tpu.concatenate %61, %64 in 0 : vector<8x16xf32>, vector<8x16xf32> -> vector<16x16xf32>
    %66 = vector.extract_strided_slice %56 {offsets = [0, 0], sizes = [16, 8], strides = [1, 1]} : vector<16x96xf32> to vector<16x8xf32>
    %67 = vector.extract_strided_slice %56 {offsets = [0, 32], sizes = [16, 8], strides = [1, 1]} : vector<16x96xf32> to vector<16x8xf32>
    %68 = vector.extract_strided_slice %56 {offsets = [0, 64], sizes = [16, 8], strides = [1, 1]} : vector<16x96xf32> to vector<16x8xf32>
    %c0_34 = arith.constant 0 : index
    %69 = memref.load %arg2[%c0_34] : memref<4xf32, #tpu.memory_space<smem>>
    %70 = vector.broadcast %69 : f32 to vector<16x8xf32>
    %71 = arith.mulf %68, %70 : vector<16x8xf32>
    %cst_35 = arith.constant dense<0.000000e+00> : vector<16x16xf32>
    %72 = tpu.matmul %66, %67, %cst_35 {dimension_numbers = #tpu.dot_dimension_numbers<[1], [1], [0], [0], [0, 0, 1, 0], [], []>} : vector<16x8xf32>, vector<16x8xf32>, vector<16x16xf32> -> vector<16x16xf32>
    %73 = arith.addf %72, %65 : vector<16x16xf32>
    %cst_36 = arith.constant dense<0xFF800000> : vector<16xf32>
    %74 = vector.multi_reduction <maximumf>, %73, %cst_36 [1] : vector<16x16xf32> to vector<16xf32>
    %75 = vector.shape_cast %74 : vector<16xf32> to vector<16x1xf32>
    %76 = vector.broadcast %75 : vector<16x1xf32> to vector<16x16xf32>
    %77 = arith.subf %73, %76 : vector<16x16xf32>
    %78 = math.exp %77 : vector<16x16xf32>
    %cst_37 = arith.constant dense<0.000000e+00> : vector<16xf32>
    %79 = vector.multi_reduction <add>, %78, %cst_37 [1] : vector<16x16xf32> to vector<16xf32>
    %80 = vector.shape_cast %79 : vector<16xf32> to vector<16x1xf32>
    %81 = vector.broadcast %80 : vector<16x1xf32> to vector<16x16xf32>
    %82 = arith.divf %78, %81 : vector<16x16xf32>
    %cst_38 = arith.constant dense<0.000000e+00> : vector<16x8xf32>
    %83 = tpu.matmul %82, %71, %cst_38 {dimension_numbers = #tpu.dot_dimension_numbers<[1], [0], [0], [1], [0, 0, 1, 1], [], []>} : vector<16x16xf32>, vector<16x8xf32>, vector<16x8xf32> -> vector<16x8xf32>
    %84 = vector.extract_strided_slice %56 {offsets = [0, 8], sizes = [16, 8], strides = [1, 1]} : vector<16x96xf32> to vector<16x8xf32>
    %85 = vector.extract_strided_slice %56 {offsets = [0, 40], sizes = [16, 8], strides = [1, 1]} : vector<16x96xf32> to vector<16x8xf32>
    %86 = vector.extract_strided_slice %56 {offsets = [0, 72], sizes = [16, 8], strides = [1, 1]} : vector<16x96xf32> to vector<16x8xf32>
    %c1 = arith.constant 1 : index
    %87 = memref.load %arg2[%c1] : memref<4xf32, #tpu.memory_space<smem>>
    %88 = vector.broadcast %87 : f32 to vector<16x8xf32>
    %89 = arith.mulf %86, %88 : vector<16x8xf32>
    %cst_39 = arith.constant dense<0.000000e+00> : vector<16x16xf32>
    %90 = tpu.matmul %84, %85, %cst_39 {dimension_numbers = #tpu.dot_dimension_numbers<[1], [1], [0], [0], [0, 0, 1, 0], [], []>} : vector<16x8xf32>, vector<16x8xf32>, vector<16x16xf32> -> vector<16x16xf32>
    %91 = arith.addf %90, %65 : vector<16x16xf32>
    %cst_40 = arith.constant dense<0xFF800000> : vector<16xf32>
    %92 = vector.multi_reduction <maximumf>, %91, %cst_40 [1] : vector<16x16xf32> to vector<16xf32>
    %93 = vector.shape_cast %92 : vector<16xf32> to vector<16x1xf32>
    %94 = vector.broadcast %93 : vector<16x1xf32> to vector<16x16xf32>
    %95 = arith.subf %91, %94 : vector<16x16xf32>
    %96 = math.exp %95 : vector<16x16xf32>
    %cst_41 = arith.constant dense<0.000000e+00> : vector<16xf32>
    %97 = vector.multi_reduction <add>, %96, %cst_41 [1] : vector<16x16xf32> to vector<16xf32>
    %98 = vector.shape_cast %97 : vector<16xf32> to vector<16x1xf32>
    %99 = vector.broadcast %98 : vector<16x1xf32> to vector<16x16xf32>
    %100 = arith.divf %96, %99 : vector<16x16xf32>
    %cst_42 = arith.constant dense<0.000000e+00> : vector<16x8xf32>
    %101 = tpu.matmul %100, %89, %cst_42 {dimension_numbers = #tpu.dot_dimension_numbers<[1], [0], [0], [1], [0, 0, 1, 1], [], []>} : vector<16x16xf32>, vector<16x8xf32>, vector<16x8xf32> -> vector<16x8xf32>
    %102 = vector.extract_strided_slice %56 {offsets = [0, 16], sizes = [16, 8], strides = [1, 1]} : vector<16x96xf32> to vector<16x8xf32>
    %103 = vector.extract_strided_slice %56 {offsets = [0, 48], sizes = [16, 8], strides = [1, 1]} : vector<16x96xf32> to vector<16x8xf32>
    %104 = vector.extract_strided_slice %56 {offsets = [0, 80], sizes = [16, 8], strides = [1, 1]} : vector<16x96xf32> to vector<16x8xf32>
    %c2 = arith.constant 2 : index
    %105 = memref.load %arg2[%c2] : memref<4xf32, #tpu.memory_space<smem>>
    %106 = vector.broadcast %105 : f32 to vector<16x8xf32>
    %107 = arith.mulf %104, %106 : vector<16x8xf32>
    %cst_43 = arith.constant dense<0.000000e+00> : vector<16x16xf32>
    %108 = tpu.matmul %102, %103, %cst_43 {dimension_numbers = #tpu.dot_dimension_numbers<[1], [1], [0], [0], [0, 0, 1, 0], [], []>} : vector<16x8xf32>, vector<16x8xf32>, vector<16x16xf32> -> vector<16x16xf32>
    %109 = arith.addf %108, %65 : vector<16x16xf32>
    %cst_44 = arith.constant dense<0xFF800000> : vector<16xf32>
    %110 = vector.multi_reduction <maximumf>, %109, %cst_44 [1] : vector<16x16xf32> to vector<16xf32>
    %111 = vector.shape_cast %110 : vector<16xf32> to vector<16x1xf32>
    %112 = vector.broadcast %111 : vector<16x1xf32> to vector<16x16xf32>
    %113 = arith.subf %109, %112 : vector<16x16xf32>
    %114 = math.exp %113 : vector<16x16xf32>
    %cst_45 = arith.constant dense<0.000000e+00> : vector<16xf32>
    %115 = vector.multi_reduction <add>, %114, %cst_45 [1] : vector<16x16xf32> to vector<16xf32>
    %116 = vector.shape_cast %115 : vector<16xf32> to vector<16x1xf32>
    %117 = vector.broadcast %116 : vector<16x1xf32> to vector<16x16xf32>
    %118 = arith.divf %114, %117 : vector<16x16xf32>
    %cst_46 = arith.constant dense<0.000000e+00> : vector<16x8xf32>
    %119 = tpu.matmul %118, %107, %cst_46 {dimension_numbers = #tpu.dot_dimension_numbers<[1], [0], [0], [1], [0, 0, 1, 1], [], []>} : vector<16x16xf32>, vector<16x8xf32>, vector<16x8xf32> -> vector<16x8xf32>
    %120 = vector.extract_strided_slice %56 {offsets = [0, 24], sizes = [16, 8], strides = [1, 1]} : vector<16x96xf32> to vector<16x8xf32>
    %121 = vector.extract_strided_slice %56 {offsets = [0, 56], sizes = [16, 8], strides = [1, 1]} : vector<16x96xf32> to vector<16x8xf32>
    %122 = vector.extract_strided_slice %56 {offsets = [0, 88], sizes = [16, 8], strides = [1, 1]} : vector<16x96xf32> to vector<16x8xf32>
    %c3 = arith.constant 3 : index
    %123 = memref.load %arg2[%c3] : memref<4xf32, #tpu.memory_space<smem>>
    %124 = vector.broadcast %123 : f32 to vector<16x8xf32>
    %125 = arith.mulf %122, %124 : vector<16x8xf32>
    %cst_47 = arith.constant dense<0.000000e+00> : vector<16x16xf32>
    %126 = tpu.matmul %120, %121, %cst_47 {dimension_numbers = #tpu.dot_dimension_numbers<[1], [1], [0], [0], [0, 0, 1, 0], [], []>} : vector<16x8xf32>, vector<16x8xf32>, vector<16x16xf32> -> vector<16x16xf32>
    %127 = arith.addf %126, %65 : vector<16x16xf32>
    %cst_48 = arith.constant dense<0xFF800000> : vector<16xf32>
    %128 = vector.multi_reduction <maximumf>, %127, %cst_48 [1] : vector<16x16xf32> to vector<16xf32>
    %129 = vector.shape_cast %128 : vector<16xf32> to vector<16x1xf32>
    %130 = vector.broadcast %129 : vector<16x1xf32> to vector<16x16xf32>
    %131 = arith.subf %127, %130 : vector<16x16xf32>
    %132 = math.exp %131 : vector<16x16xf32>
    %cst_49 = arith.constant dense<0.000000e+00> : vector<16xf32>
    %133 = vector.multi_reduction <add>, %132, %cst_49 [1] : vector<16x16xf32> to vector<16xf32>
    %134 = vector.shape_cast %133 : vector<16xf32> to vector<16x1xf32>
    %135 = vector.broadcast %134 : vector<16x1xf32> to vector<16x16xf32>
    %136 = arith.divf %132, %135 : vector<16x16xf32>
    %cst_50 = arith.constant dense<0.000000e+00> : vector<16x8xf32>
    %137 = tpu.matmul %136, %125, %cst_50 {dimension_numbers = #tpu.dot_dimension_numbers<[1], [0], [0], [1], [0, 0, 1, 1], [], []>} : vector<16x16xf32>, vector<16x8xf32>, vector<16x8xf32> -> vector<16x8xf32>
    %138 = tpu.concatenate %83, %101, %119, %137 in 1 : vector<16x8xf32>, vector<16x8xf32>, vector<16x8xf32>, vector<16x8xf32> -> vector<16x32xf32>
    %c0_51 = arith.constant 0 : index
    %c0_52 = arith.constant 0 : index
    %139 = vector.load %arg6[%c0_51, %c0_52] : memref<32x32xf32, #tpu.memory_space<vmem>>, vector<32x32xf32>
    %cst_53 = arith.constant dense<0.000000e+00> : vector<16x32xf32>
    %140 = tpu.matmul %138, %139, %cst_53 {dimension_numbers = #tpu.dot_dimension_numbers<[1], [0], [0], [1], [0, 0, 1, 1], [], []>} : vector<16x32xf32>, vector<32x32xf32>, vector<16x32xf32> -> vector<16x32xf32>
    %141 = vector.extract_strided_slice %1 {offsets = [1, 0], sizes = [1, 32], strides = [1, 1]} : vector<4x32xf32> to vector<1x32xf32>
    %142 = vector.broadcast %141 : vector<1x32xf32> to vector<16x32xf32>
    %143 = arith.addf %140, %142 : vector<16x32xf32>
    %144 = arith.addf %51, %143 : vector<16x32xf32>
    %145 = vector.extract_strided_slice %1 {offsets = [2, 0], sizes = [1, 32], strides = [1, 1]} : vector<4x32xf32> to vector<1x32xf32>
    %146 = vector.extract_strided_slice %1 {offsets = [3, 0], sizes = [1, 32], strides = [1, 1]} : vector<4x32xf32> to vector<1x32xf32>
    %cst_54 = arith.constant dense<0.000000e+00> : vector<16xf32>
    %147 = vector.multi_reduction <add>, %144, %cst_54 [1] : vector<16x32xf32> to vector<16xf32>
    %148 = vector.shape_cast %147 : vector<16xf32> to vector<16x1xf32>
    %cst_55 = arith.constant 3.200000e+01 : f32
    %149 = vector.broadcast %cst_55 : f32 to vector<16x1xf32>
    %150 = arith.divf %148, %149 : vector<16x1xf32>
    %151 = vector.broadcast %150 : vector<16x1xf32> to vector<16x32xf32>
    %152 = arith.subf %144, %151 : vector<16x32xf32>
    %153 = arith.mulf %152, %152 : vector<16x32xf32>
    %cst_56 = arith.constant dense<0.000000e+00> : vector<16xf32>
    %154 = vector.multi_reduction <add>, %153, %cst_56 [1] : vector<16x32xf32> to vector<16xf32>
    %155 = vector.shape_cast %154 : vector<16xf32> to vector<16x1xf32>
    %cst_57 = arith.constant 3.200000e+01 : f32
    %156 = vector.broadcast %cst_57 : f32 to vector<16x1xf32>
    %157 = arith.divf %155, %156 : vector<16x1xf32>
    %158 = vector.broadcast %150 : vector<16x1xf32> to vector<16x32xf32>
    %159 = arith.subf %144, %158 : vector<16x32xf32>
    %cst_58 = arith.constant 9.99999974E-6 : f32
    %160 = vector.broadcast %cst_58 : f32 to vector<16x1xf32>
    %161 = arith.addf %157, %160 : vector<16x1xf32>
    %162 = math.rsqrt %161 : vector<16x1xf32>
    %163 = vector.broadcast %162 : vector<16x1xf32> to vector<16x32xf32>
    %164 = arith.mulf %159, %163 : vector<16x32xf32>
    %165 = vector.broadcast %145 : vector<1x32xf32> to vector<16x32xf32>
    %166 = arith.mulf %164, %165 : vector<16x32xf32>
    %167 = vector.broadcast %146 : vector<1x32xf32> to vector<16x32xf32>
    %168 = arith.addf %166, %167 : vector<16x32xf32>
    %c0_59 = arith.constant 0 : index
    %c0_60 = arith.constant 0 : index
    %169 = vector.load %arg7[%c0_59, %c0_60] : memref<32x64xf32, #tpu.memory_space<vmem>>, vector<32x64xf32>
    %cst_61 = arith.constant dense<0.000000e+00> : vector<16x64xf32>
    %170 = tpu.matmul %168, %169, %cst_61 {dimension_numbers = #tpu.dot_dimension_numbers<[1], [0], [0], [1], [0, 0, 1, 1], [], []>} : vector<16x32xf32>, vector<32x64xf32>, vector<16x64xf32> -> vector<16x64xf32>
    %171 = vector.extract_strided_slice %2 {offsets = [0, 0], sizes = [1, 64], strides = [1, 1]} : vector<3x64xf32> to vector<1x64xf32>
    %172 = vector.broadcast %171 : vector<1x64xf32> to vector<16x64xf32>
    %173 = arith.addf %170, %172 : vector<16x64xf32>
    %174 = vector.extract_strided_slice %2 {offsets = [1, 0], sizes = [1, 64], strides = [1, 1]} : vector<3x64xf32> to vector<1x64xf32>
    %175 = vector.extract_strided_slice %2 {offsets = [2, 0], sizes = [1, 64], strides = [1, 1]} : vector<3x64xf32> to vector<1x64xf32>
    %cst_62 = arith.constant dense<0.000000e+00> : vector<16xf32>
    %176 = vector.multi_reduction <add>, %173, %cst_62 [1] : vector<16x64xf32> to vector<16xf32>
    %177 = vector.shape_cast %176 : vector<16xf32> to vector<16x1xf32>
    %cst_63 = arith.constant 6.400000e+01 : f32
    %178 = vector.broadcast %cst_63 : f32 to vector<16x1xf32>
    %179 = arith.divf %177, %178 : vector<16x1xf32>
    %180 = vector.broadcast %179 : vector<16x1xf32> to vector<16x64xf32>
    %181 = arith.subf %173, %180 : vector<16x64xf32>
    %182 = arith.mulf %181, %181 : vector<16x64xf32>
    %cst_64 = arith.constant dense<0.000000e+00> : vector<16xf32>
    %183 = vector.multi_reduction <add>, %182, %cst_64 [1] : vector<16x64xf32> to vector<16xf32>
    %184 = vector.shape_cast %183 : vector<16xf32> to vector<16x1xf32>
    %cst_65 = arith.constant 6.400000e+01 : f32
    %185 = vector.broadcast %cst_65 : f32 to vector<16x1xf32>
    %186 = arith.divf %184, %185 : vector<16x1xf32>
    %187 = vector.broadcast %179 : vector<16x1xf32> to vector<16x64xf32>
    %188 = arith.subf %173, %187 : vector<16x64xf32>
    %cst_66 = arith.constant 9.99999974E-6 : f32
    %189 = vector.broadcast %cst_66 : f32 to vector<16x1xf32>
    %190 = arith.addf %186, %189 : vector<16x1xf32>
    %191 = math.rsqrt %190 : vector<16x1xf32>
    %192 = vector.broadcast %191 : vector<16x1xf32> to vector<16x64xf32>
    %193 = arith.mulf %188, %192 : vector<16x64xf32>
    %194 = vector.broadcast %174 : vector<1x64xf32> to vector<16x64xf32>
    %195 = arith.mulf %193, %194 : vector<16x64xf32>
    %196 = vector.broadcast %175 : vector<1x64xf32> to vector<16x64xf32>
    %197 = arith.addf %195, %196 : vector<16x64xf32>
    %c0_67 = arith.constant 0 : index
    %c0_68 = arith.constant 0 : index
    %198 = vector.load %arg10[%c0_67, %c0_68] : memref<16x64xf32, #tpu.memory_space<vmem>>, vector<16x64xf32>
    tpu.vector_store %arg10[%c0_67, %c0_68], %197 {strides = array<i32>} : memref<16x64xf32, #tpu.memory_space<vmem>>, vector<16x64xf32>,
    return
  }
}

</mosaic_0001>

<llo_original>
// kernel: plugin_forward.1
$region0: #{plugin_forward.1}
  #allocation0 [shape = 'u32[]', space=smem, size = 0x4, offset = 0x4, fixed_abs, tag = 'smem constant byte address 0x4 - core index']
  #allocation1 [shape = 'u32[72,128]{1,0:T(1,128)}', space=vmem, size = 0x9000, scoped, tag = 'internal scratch']
  %s0 = inlined_call_operand.hbm [shape: f32[16,64], index: 0, kind: input, shape index: {}]
  %s1 = inlined_call_operand.hbm [shape: f32[2,1,8,8], index: 1, kind: input, shape index: {}]
  %s2 = inlined_call_operand.vmem [shape: f32[4], index: 2, kind: input, shape index: {}]
  %s3 = inlined_call_operand.vmem [shape: f32[64,32], index: 3, kind: input, shape index: {}]
  %s4 = inlined_call_operand.vmem [shape: f32[32,96], index: 4, kind: input, shape index: {}]
  %s5 = inlined_call_operand.hbm [shape: f32[1,96], index: 5, kind: input, shape index: {}]
  %s6 = inlined_call_operand.vmem [shape: f32[32,32], index: 6, kind: input, shape index: {}]
  %s7 = inlined_call_operand.vmem [shape: f32[32,64], index: 7, kind: input, shape index: {}]
  %s8 = inlined_call_operand.hbm [shape: f32[4,32], index: 8, kind: input, shape index: {}]
  %s9 = inlined_call_operand.hbm [shape: f32[3,64], index: 9, kind: input, shape index: {}]
  %s10 = inlined_call_operand.hbm [shape: f32[16,64], index: 10, kind: output, shape index: {}]
  %s11 = sld [smem:[#allocation0]]
  $region74: #{plugin_forward.1} parent=0
    _
  %s13 = ssub.s32 1, %s11
  %s14 = scalar_select 0, %s13, %s11
  $region1: #{plugin_forward.1} parent=0
    #allocation2 [shape = 'u8[8192]{0}', space=vmem, size = 0x2000, scoped, tag = 'input window, operand 0, single buffered']
    #allocation3 [shape = 's32[1]{0}', space=sflag, size = 0x4, scoped, tag = 'scoped memory for plugin_forward.1']
    #allocation4 [shape = 's32[1]{0}', space=sflag, size = 0x4, scoped, tag = 'scoped memory for plugin_forward.1']
    #allocation5 [shape = 's32[1]{0}', space=sflag, size = 0x4, scoped, tag = 'scoped memory for plugin_forward.1']
    #allocation6 [shape = 'u8[8192]{0}', space=vmem, size = 0x2000, scoped, tag = 'input window, operand 1, single buffered']
    #allocation7 [shape = 's32[1]{0}', space=sflag, size = 0x4, scoped, tag = 'scoped memory for plugin_forward.1']
    #allocation8 [shape = 'u8[512]{0}', space=smem, size = 0x200, scoped, tag = 'input window, operand 2, single buffered']
    #allocation9 [shape = 'u8[512]{0}', space=vmem, size = 0x400, scoped, tag = 'input window, operand 5, single buffered']
    #allocation10 [shape = 'u8[2048]{0}', space=vmem, size = 0x800, scoped, tag = 'input window, operand 8, single buffered']
    #allocation11 [shape = 's32[1]{0}', space=sflag, size = 0x4, scoped, tag = 'scoped memory for plugin_forward.1']
    #allocation12 [shape = 'u8[2048]{0}', space=vmem, size = 0x800, scoped, tag = 'input window, operand 9, single buffered']
    #allocation13 [shape = 'u8[8192]{0}', space=vmem, size = 0x2000, scoped, tag = 'output window, operand 0, single buffered']
    %15 = vsyncpa [#allocation3], 0
    %16 = vsyncpa [#allocation7], 0
    %17 = vsyncpa [#allocation5], 0
    %18 = vsyncpa [#allocation11], 0
    %19 = vsyncpa [#allocation4], 0
    // Predicated region
    $region2: #{plugin_forward.1} parent=1 // pred_check
      _
    $region3: #{plugin_forward.1} parent=1 // pred_check_branch
      %21 = sbr.rel (0) target = $region5
    $region4: #{plugin_forward.1} parent=1 // pred_region
      %23 = vsyncadd [#allocation3], 0
      %s24 = sshll.u32 %s0, 4
      %s25 = int_to_ptr.hbm [resolvable:$true] %s24
      %s26 = sshll.u32 [#allocation2], 4
      %s27 = int_to_ptr.vmem [resolvable:$true] %s26
      %32 = dma.hbm_to_vmem [thread:$0]  %s25, 256, %s27, [#allocation3], 128, 128, 8
    $region5: #{plugin_forward.1} parent=1 // pred_fallthru
      _
    // Predicated region
    $region6: #{plugin_forward.1} parent=1 // pred_check
      _
    $region7: #{plugin_forward.1} parent=1 // pred_check_branch
      %34 = sbr.rel (0) target = $region9
    $region8: #{plugin_forward.1} parent=1 // pred_region
      %36 = vsyncadd [#allocation7], 0
      %s37 = sshll.u32 %s1, 4
      %s38 = int_to_ptr.hbm [resolvable:$true] %s37
      %s39 = sshll.u32 [#allocation6], 4
      %s40 = int_to_ptr.vmem [resolvable:$true] %s39
      %45 = dma.hbm_to_vmem [thread:$0]  %s38, 256, %s40, [#allocation7], 128, 128, 8
    $region9: #{plugin_forward.1} parent=1 // pred_fallthru
      _
    // Predicated region
    $region10: #{plugin_forward.1} parent=1 // pred_check
      _
    $region11: #{plugin_forward.1} parent=1 // pred_check_branch
      %47 = sbr.rel (0) target = $region13
    $region12: #{plugin_forward.1} parent=1 // pred_region
      %49 = vsyncadd [#allocation5], 0
      %s51 = sshll.u32 %s2, 4
      %s52 = int_to_ptr.vmem [resolvable:$true] %s51
      %54 = dma.vmem_to_smem %s52, 16, [#allocation8], [#allocation5]
    $region13: #{plugin_forward.1} parent=1 // pred_fallthru
      _
    // Predicated region
    $region14: #{plugin_forward.1} parent=1 // pred_check
      _
    $region15: #{plugin_forward.1} parent=1 // pred_check_branch
      %56 = sbr.rel (0) target = $region17
    $region16: #{plugin_forward.1} parent=1 // pred_region
      _
    $region17: #{plugin_forward.1} parent=1 // pred_fallthru
      _
    // Predicated region
    $region18: #{plugin_forward.1} parent=1 // pred_check
      _
    $region19: #{plugin_forward.1} parent=1 // pred_check_branch
      %58 = sbr.rel (0) target = $region21
    $region20: #{plugin_forward.1} parent=1 // pred_region
      _
    $region21: #{plugin_forward.1} parent=1 // pred_fallthru
      _
    // Predicated region
    $region22: #{plugin_forward.1} parent=1 // pred_check
      _
    $region23: #{plugin_forward.1} parent=1 // pred_check_branch
      %60 = sbr.rel (0) target = $region25
    $region24: #{plugin_forward.1} parent=1 // pred_region
      %62 = vsyncadd [#allocation7], 0
      %s64 = sshll.u32 %s5, 4
      %s65 = int_to_ptr.hbm [resolvable:$true] %s64
      %s66 = sshll.u32 [#allocation9], 4
      %s67 = int_to_ptr.vmem [resolvable:$true] %s66
      %69 = dma.hbm_to_vmem [thread:$0]  %s65, 16, %s67, [#allocation7]
    $region25: #{plugin_forward.1} parent=1 // pred_fallthru
      _
    // Predicated region
    $region26: #{plugin_forward.1} parent=1 // pred_check
      _
    $region27: #{plugin_forward.1} parent=1 // pred_check_branch
      %71 = sbr.rel (0) target = $region29
    $region28: #{plugin_forward.1} parent=1 // pred_region
      _
    $region29: #{plugin_forward.1} parent=1 // pred_fallthru
      _
    // Predicated region
    $region30: #{plugin_forward.1} parent=1 // pred_check
      _
    $region31: #{plugin_forward.1} parent=1 // pred_check_branch
      %73 = sbr.rel (0) target = $region33
    $region32: #{plugin_forward.1} parent=1 // pred_region
      _
    $region33: #{plugin_forward.1} parent=1 // pred_fallthru
      _
    // Predicated region
    $region34: #{plugin_forward.1} parent=1 // pred_check
      _
    $region35: #{plugin_forward.1} parent=1 // pred_check_branch
      %75 = sbr.rel (0) target = $region37
    $region36: #{plugin_forward.1} parent=1 // pred_region
      %77 = vsyncadd [#allocation11], 0
      %s79 = sshll.u32 %s8, 4
      %s80 = int_to_ptr.hbm [resolvable:$true] %s79
      %s81 = sshll.u32 [#allocation10], 4
      %s82 = int_to_ptr.vmem [resolvable:$true] %s81
      %84 = dma.hbm_to_vmem [thread:$0]  %s80, 64, %s82, [#allocation11]
    $region37: #{plugin_forward.1} parent=1 // pred_fallthru
      _
    // Predicated region
    $region38: #{plugin_forward.1} parent=1 // pred_check
      _
    $region39: #{plugin_forward.1} parent=1 // pred_check_branch
      %86 = sbr.rel (0) target = $region41
    $region40: #{plugin_forward.1} parent=1 // pred_region
      %88 = vsyncadd [#allocation11], 0
      %s90 = sshll.u32 %s9, 4
      %s91 = int_to_ptr.hbm [resolvable:$true] %s90
      %s92 = sshll.u32 [#allocation12], 4
      %s93 = int_to_ptr.vmem [resolvable:$true] %s92
      %95 = dma.hbm_to_vmem [thread:$0]  %s91, 64, %s93, [#allocation11]
    $region41: #{plugin_forward.1} parent=1 // pred_fallthru
      _
    // Predicated region
    $region42: #{plugin_forward.1} parent=1 // pred_check
      _
    $region43: #{plugin_forward.1} parent=1 // pred_check_branch
      %97 = sbr.rel (0) target = $region45
    $region44: #{plugin_forward.1} parent=1 // pred_region
      %99 = dma.done [#allocation3], 256
    $region45: #{plugin_forward.1} parent=1 // pred_fallthru
      _
    // Predicated region
    $region46: #{plugin_forward.1} parent=1 // pred_check
      _
    $region47: #{plugin_forward.1} parent=1 // pred_check_branch
      %101 = sbr.rel (0) target = $region49
    $region48: #{plugin_forward.1} parent=1 // pred_region
      %103 = dma.done [#allocation7], 256
    $region49: #{plugin_forward.1} parent=1 // pred_fallthru
      _
    // Predicated region
    $region50: #{plugin_forward.1} parent=1 // pred_check
      _
    $region51: #{plugin_forward.1} parent=1 // pred_check_branch
      %105 = sbr.rel (0) target = $region53
    $region52: #{plugin_forward.1} parent=1 // pred_region
      %107 = dma.done [#allocation5], 16
    $region53: #{plugin_forward.1} parent=1 // pred_fallthru
      _
    // Predicated region
    $region54: #{plugin_forward.1} parent=1 // pred_check
      _
    $region55: #{plugin_forward.1} parent=1 // pred_check_branch
      %109 = sbr.rel (0) target = $region57
    $region56: #{plugin_forward.1} parent=1 // pred_region
      %111 = dma.done [#allocation7], 16
    $region57: #{plugin_forward.1} parent=1 // pred_fallthru
      _
    // Predicated region
    $region58: #{plugin_forward.1} parent=1 // pred_check
      _
    $region59: #{plugin_forward.1} parent=1 // pred_check_branch
      %113 = sbr.rel (0) target = $region61
    $region60: #{plugin_forward.1} parent=1 // pred_region
      %115 = dma.done [#allocation11], 64
    $region61: #{plugin_forward.1} parent=1 // pred_fallthru
      _
    // Predicated region
    $region62: #{plugin_forward.1} parent=1 // pred_check
      _
    $region63: #{plugin_forward.1} parent=1 // pred_check_branch
      %117 = sbr.rel (0) target = $region65
    $region64: #{plugin_forward.1} parent=1 // pred_region
      %119 = dma.done [#allocation11], 64
    $region65: #{plugin_forward.1} parent=1 // pred_fallthru
      _
    %120 = sfence
    %v121 = vld [vmem:[#allocation2] sm:$0xff]
    %v122 = vld [vmem:[#allocation2 + $0x8] sm:$0xff]
    %v123 = vld [vmem:[#allocation10] sm:$0xf]
    %v124 = vld [vmem:[#allocation12] sm:$0x7]
    %v125 = vld [vmem:[%s3] sm:$0xff]
    %v126 = vld [vmem:[%s3 + $0x8] sm:$0xff]
    %v127 = vld [vmem:[%s3 + $0x10] sm:$0xff]
    %v128 = vld [vmem:[%s3 + $0x18] sm:$0xff]
    %v129 = vld [vmem:[%s3 + $0x20] sm:$0xff]
    %v130 = vld [vmem:[%s3 + $0x28] sm:$0xff]
    %v131 = vld [vmem:[%s3 + $0x30] sm:$0xff]
    %v132 = vld [vmem:[%s3 + $0x38] sm:$0xff]
    %v133 = vperm.slane %v123, 0
    %vm134 = vcmask 523264
    %v136 = vsel %vm134, %v121, 0
    %v139 = vsel %vm134, %v122, 0
    %141 = vmatpush.msra.mxu0 0.0
    %142 = vmatpush.msra.mxu0 0.0
    %143 = vmatpush.msra.mxu0 0.0
    %144 = vmatpush.msra.mxu0 0.0
    %145 = vmatpush.msra.mxu0 0.0
    %146 = vmatpush.msra.mxu0 0.0
    %147 = vmatpush.msra.mxu0 0.0
    %148 = vmatpush.msra.mxu0 0.0
    %149 = vmatpush.msra.mxu0 %v132
    %150 = vmatpush.msra.mxu0 %v131
    %151 = vmatpush.msra.mxu0 %v130
    %152 = vmatpush.msra.mxu0 %v129
    %153 = vmatpush.msra.mxu0 %v128
    %154 = vmatpush.msra.mxu0 %v127
    %155 = vmatpush.msra.mxu0 %v126
    %156 = vmatpush.msra.mxu0 %v125
    %157 = vmatmul.f32.gmra.mxu0 %v136
    %v158 = vpop.f32.mrf.mxu0
    %v159 = vadd.f32 %v133, %v158
    %160 = vmatmul.f32.gmra.mxu0 %v139
    %v161 = vpop.f32.mrf.mxu0
    %v162 = vadd.f32 %v133, %v161
    %163 = vdwg.mxu0
    %v164 = vmul.f32 %v159, 0.70710677
    %v165 = vmul.f32 %v162, 0.70710677
    %vm166 = vcmp.ge.f32.partialorder %v164, 0.0
    %vm167 = vcmp.ge.f32.partialorder %v165, 0.0
    %v168 = vsub.f32 0.0, %v164
    %v169 = vsub.f32 0.0, %v165
    %v170 = vsel %vm166, %v164, %v168
    %v171 = vsel %vm167, %v165, %v169
    %v172 = vmul.f32 %v170, 0.3275911
    %v173 = vmul.f32 %v171, 0.3275911
    %v174 = vadd.f32 %v172, 1.0
    %v175 = vadd.f32 %v173, 1.0
    %v176 = vrcp.pop %v174
    %v177 = vmul.f32 %v174, %v176
    %v178 = vsub.f32 1.0, %v177
    %v179 = vmul.f32 %v176, %v178
    %v180 = vadd.f32 %v176, %v179
    %vm181 = vweird.f32 %v174
    %vm182 = vweird.f32 %v176
    %vm183 = vmor %vm181, %vm182
    %v184 = vsel %vm183, %v176, %v180
    %v185 = vand.u32 2147483647, %v174
    %vm186 = vcmp.eq.f32.partialorder %v185, 8.507059e+37
    %v187 = vand.u32 %v174, 2147483648
    %v188 = vor.u32 1.1754944e-38, %v187
    %v189 = vsel %vm186, %v188, %v184
    %v190 = vmul.f32 1.0, %v189
    %v191 = vrcp.pop %v175
    %v192 = vmul.f32 %v175, %v191
    %v193 = vsub.f32 1.0, %v192
    %v194 = vmul.f32 %v191, %v193
    %v195 = vadd.f32 %v191, %v194
    %vm196 = vweird.f32 %v175
    %vm197 = vweird.f32 %v191
    %vm198 = vmor %vm196, %vm197
    %v199 = vsel %vm198, %v191, %v195
    %v200 = vand.u32 2147483647, %v175
    %vm201 = vcmp.eq.f32.partialorder %v200, 8.507059e+37
    %v202 = vand.u32 %v175, 2147483648
    %v203 = vor.u32 1.1754944e-38, %v202
    %v204 = vsel %vm201, %v203, %v199
    %v205 = vmul.f32 1.0, %v204
    %v206 = vmul.f32 %v190, 1.0614054
    %v207 = vmul.f32 %v205, 1.0614054
    %v208 = vsub.f32 %v206, 1.4531521
    %v209 = vsub.f32 %v207, 1.4531521
    %v210 = vmul.f32 %v208, %v190
    %v211 = vmul.f32 %v209, %v205
    %v212 = vadd.f32 %v210, 1.4214138
    %v213 = vadd.f32 %v211, 1.4214138
    %v214 = vmul.f32 %v212, %v190
    %v215 = vmul.f32 %v213, %v205
    %v216 = vsub.f32 %v214, 0.28449672
    %v217 = vsub.f32 %v215, 0.28449672
    %v218 = vmul.f32 %v216, %v190
    %v219 = vmul.f32 %v217, %v205
    %v220 = vadd.f32 %v218, 0.2548296
    %v221 = vadd.f32 %v219, 0.2548296
    %v222 = vmul.f32 %v220, %v190
    %v223 = vmul.f32 %v221, %v205
    %v224 = vsub.f32 0.0, %v170
    %v225 = vsub.f32 0.0, %v171
    %v226 = vmul.f32 %v224, %v170
    %v227 = vmul.f32 %v225, %v171
    %v228 = vmul.f32 %v226, 1.442695
    %v229 = vpow.pop %v228
    %v230 = vmul.f32 %v227, 1.442695
    %v231 = vpow.pop %v230
    %v232 = vmul.f32 %v222, %v229
    %v233 = vmul.f32 %v223, %v231
    %v234 = vsub.f32 1.0, %v232
    %v235 = vsub.f32 1.0, %v233
    %v236 = vsub.f32 0.0, %v234
    %v237 = vsub.f32 0.0, %v235
    %v238 = vsel %vm166, %v234, %v236
    %v239 = vsel %vm167, %v235, %v237
    %v240 = vmul.f32 %v159, 0.5
    %v241 = vmul.f32 %v162, 0.5
    %v242 = vadd.f32 %v238, 1.0
    %v243 = vadd.f32 %v239, 1.0
    %v244 = vmul.f32 %v240, %v242
    %v245 = vmul.f32 %v241, %v243
    %v246 = vld [vmem:[%s4] sm:$0xff]
    %v247 = vld [vmem:[%s4 + $0x8] sm:$0xff]
    %v248 = vld [vmem:[%s4 + $0x10] sm:$0xff]
    %v249 = vld [vmem:[%s4 + $0x18] sm:$0xff]
    %v250 = vld [vmem:[#allocation9] sm:$0x1]
    %v252 = vperm.slane %v250, 0
    %vm254 = vcmask 261120
    %v256 = vsel %vm254, %v244, 0
    %v259 = vsel %vm254, %v245, 0
    %261 = vmatpush.msra.mxu0 0.0
    %262 = vmatpush.msra.mxu0 0.0
    %263 = vmatpush.msra.mxu0 0.0
    %264 = vmatpush.msra.mxu0 0.0
    %265 = vmatpush.msra.mxu0 0.0
    %266 = vmatpush.msra.mxu0 0.0
    %267 = vmatpush.msra.mxu0 0.0
    %268 = vmatpush.msra.mxu0 0.0
    %269 = vmatpush.msra.mxu0 0.0
    %270 = vmatpush.msra.mxu0 0.0
    %271 = vmatpush.msra.mxu0 0.0
    %272 = vmatpush.msra.mxu0 0.0
    %273 = vmatpush.msra.mxu0 %v249
    %274 = vmatpush.msra.mxu0 %v248
    %275 = vmatpush.msra.mxu0 %v247
    %276 = vmatpush.msra.mxu0 %v246
    %277 = vmatmul.f32.gmra.mxu0 %v256
    %v278 = vpop.f32.mrf.mxu0
    %v279 = vadd.f32 %v252, %v278
    %280 = vmatmul.f32.gmra.mxu0 %v259
    %v281 = vpop.f32.mrf.mxu0
    %v282 = vadd.f32 %v252, %v281
    %283 = vdwg.mxu0
    %v284 = vld [vmem:[#allocation6] sm:$0xff]
    %v285 = vld [vmem:[#allocation6 + $0x8] sm:$0xff]
    %vm286 = vcmask 64512
    %v287 = vsel %vm286, %v284, -1e+09
    %289 = vrot.lane.b32.xlu0 %v285, 8
    %v290 = vpop.permute.xlu0 %289
    %v292 = vsel %vm286, -1e+09, %v290
    %s293 = sld [smem:[#allocation8]]
    %v294 = vstv %s293
    %v295 = vmul.f32 %v279, %v294
    %v296 = vmul.f32 %v282, %v294
    %299 = vrot.lane.b32.xlu0 %v279, 96
    %v300 = vpop.permute.xlu0 %299
    %301 = vrot.lane.b32.xlu0 %v282, 96
    %v302 = vpop.permute.xlu0 %301
    %v303 = vsel %vm286, %v279, 0
    %v305 = vsel %vm286, %v282, 0
    %v307 = vsel %vm286, %v300, 0
    %v309 = vsel %vm286, %v302, 0
    %311 = vmatpush.xpose.msra.mxu0 0.0
    %312 = vmatpush.xpose.msra.mxu0 0.0
    %313 = vmatpush.xpose.msra.mxu0 0.0
    %314 = vmatpush.xpose.msra.mxu0 0.0
    %315 = vmatpush.xpose.msra.mxu0 0.0
    %316 = vmatpush.xpose.msra.mxu0 0.0
    %317 = vmatpush.xpose.msra.mxu0 0.0
    %318 = vmatpush.xpose.msra.mxu0 0.0
    %319 = vmatpush.xpose.msra.mxu0 0.0
    %320 = vmatpush.xpose.msra.mxu0 0.0
    %321 = vmatpush.xpose.msra.mxu0 0.0
    %322 = vmatpush.xpose.msra.mxu0 0.0
    %323 = vmatpush.xpose.msra.mxu0 0.0
    %324 = vmatpush.xpose.msra.mxu0 0.0
    %325 = vmatpush.xpose.msra.mxu0 %v309
    %326 = vmatpush.xpose.msra.mxu0 %v307
    %327 = vmatmul.f32.gmra.mxu0 %v303
    %v328 = vpop.f32.mrf.mxu0
    %v329 = vadd.f32 %v287, %v328
    %330 = vmatmul.f32.gmra.mxu0 %v305
    %v331 = vpop.f32.mrf.mxu0
    %v332 = vadd.f32 %v292, %v331
    %333 = vdwg.mxu0
    %vm334 = vcmask 130048
    %v335 = vsel %vm334, %v329, -inf
    %336 = vmax.xlane.f32.xlu0 %v335
    %v337 = vpop.xlane.xlu0 %336
    %v338 = vsel %vm334, %v332, -inf
    %339 = vmax.xlane.f32.xlu0 %v338
    %v340 = vpop.xlane.xlu0 %339
    %v341 = vsub.f32 %v329, %v337
    %v342 = vsub.f32 %v332, %v340
    %v343 = vmul.f32 %v341, 1.442695
    %v344 = vpow.pop %v343
    %v345 = vmul.f32 %v342, 1.442695
    %v346 = vpow.pop %v345
    %v347 = vsel %vm334, %v344, 0.0
    %348 = vadd.xlane.f32.xlu0 %v347
    %v349 = vpop.xlane.xlu0 %348
    %v350 = vsel %vm334, %v346, 0.0
    %351 = vadd.xlane.f32.xlu0 %v350
    %v352 = vpop.xlane.xlu0 %351
    %v353 = vrcp.pop %v349
    %v354 = vmul.f32 %v349, %v353
    %v355 = vsub.f32 1.0, %v354
    %v356 = vmul.f32 %v353, %v355
    %v357 = vadd.f32 %v353, %v356
    %vm358 = vweird.f32 %v349
    %vm359 = vweird.f32 %v353
    %vm360 = vmor %vm358, %vm359
    %v361 = vsel %vm360, %v353, %v357
    %v362 = vand.u32 2147483647, %v349
    %vm363 = vcmp.eq.f32.partialorder %v362, 8.507059e+37
    %v364 = vand.u32 %v349, 2147483648
    %v365 = vor.u32 1.1754944e-38, %v364
    %v366 = vsel %vm363, %v365, %v361
    %v367 = vmul.f32 %v344, %v366
    %v368 = vrcp.pop %v352
    %v369 = vmul.f32 %v352, %v368
    %v370 = vsub.f32 1.0, %v369
    %v371 = vmul.f32 %v368, %v370
    %v372 = vadd.f32 %v368, %v371
    %vm373 = vweird.f32 %v352
    %vm374 = vweird.f32 %v368
    %vm375 = vmor %vm373, %vm374
    %v376 = vsel %vm375, %v368, %v372
    %v377 = vand.u32 2147483647, %v352
    %vm378 = vcmp.eq.f32.partialorder %v377, 8.507059e+37
    %v379 = vand.u32 %v352, 2147483648
    %v380 = vor.u32 1.1754944e-38, %v379
    %v381 = vsel %vm378, %v380, %v376
    %v382 = vmul.f32 %v346, %v381
    %385 = vrot.lane.b32.xlu0 %v295, 64
    %v386 = vpop.permute.xlu0 %385
    %387 = vrot.lane.b32.xlu0 %v296, 64
    %v388 = vpop.permute.xlu0 %387
    %v392 = vsel %vm334, %v367, 0
    %v395 = vsel %vm334, %v382, 0
    %397 = vmatpush.msra.mxu0 0.0
    %398 = vmatpush.msra.mxu0 0.0
    %399 = vmatpush.msra.mxu0 0.0
    %400 = vmatpush.msra.mxu0 0.0
    %401 = vmatpush.msra.mxu0 0.0
    %402 = vmatpush.msra.mxu0 0.0
    %403 = vmatpush.msra.mxu0 0.0
    %404 = vmatpush.msra.mxu0 0.0
    %405 = vmatpush.msra.mxu0 0.0
    %406 = vmatpush.msra.mxu0 0.0
    %407 = vmatpush.msra.mxu0 0.0
    %408 = vmatpush.msra.mxu0 0.0
    %409 = vmatpush.msra.mxu0 0.0
    %410 = vmatpush.msra.mxu0 0.0
    %411 = vmatpush.msra.mxu0 %v388
    %412 = vmatpush.msra.mxu0 %v386
    %413 = vmatmul.f32.gmra.mxu0 %v392
    %v414 = vpop.f32.mrf.mxu0
    %v415 = vadd.f32 0.0, %v414
    %416 = vmatmul.f32.gmra.mxu0 %v395
    %v417 = vpop.f32.mrf.mxu0
    %v418 = vadd.f32 0.0, %v417
    %419 = vdwg.mxu0
    %s420 = sld [smem:[#allocation8 + $0x1]]
    %v421 = vstv %s420
    %v422 = vmul.f32 %v279, %v421
    %v423 = vmul.f32 %v282, %v421
    %424 = vrot.lane.b32.xlu0 %v279, 120
    %v425 = vpop.permute.xlu0 %424
    %426 = vrot.lane.b32.xlu0 %v282, 120
    %v427 = vpop.permute.xlu0 %426
    %428 = vrot.lane.b32.xlu0 %v279, 88
    %v429 = vpop.permute.xlu0 %428
    %430 = vrot.lane.b32.xlu0 %v282, 88
    %v431 = vpop.permute.xlu0 %430
    %v432 = vsel %vm286, %v425, 0
    %v434 = vsel %vm286, %v427, 0
    %v436 = vsel %vm286, %v429, 0
    %v438 = vsel %vm286, %v431, 0
    %440 = vmatpush.xpose.msra.mxu0 0.0
    %441 = vmatpush.xpose.msra.mxu0 0.0
    %442 = vmatpush.xpose.msra.mxu0 0.0
    %443 = vmatpush.xpose.msra.mxu0 0.0
    %444 = vmatpush.xpose.msra.mxu0 0.0
    %445 = vmatpush.xpose.msra.mxu0 0.0
    %446 = vmatpush.xpose.msra.mxu0 0.0
    %447 = vmatpush.xpose.msra.mxu0 0.0
    %448 = vmatpush.xpose.msra.mxu0 0.0
    %449 = vmatpush.xpose.msra.mxu0 0.0
    %450 = vmatpush.xpose.msra.mxu0 0.0
    %451 = vmatpush.xpose.msra.mxu0 0.0
    %452 = vmatpush.xpose.msra.mxu0 0.0
    %453 = vmatpush.xpose.msra.mxu0 0.0
    %454 = vmatpush.xpose.msra.mxu0 %v438
    %455 = vmatpush.xpose.msra.mxu0 %v436
    %456 = vmatmul.f32.gmra.mxu0 %v432
    %v457 = vpop.f32.mrf.mxu0
    %v458 = vadd.f32 %v287, %v457
    %459 = vmatmul.f32.gmra.mxu0 %v434
    %v460 = vpop.f32.mrf.mxu0
    %v461 = vadd.f32 %v292, %v460
    %462 = vdwg.mxu0
    %v463 = vsel %vm334, %v458, -inf
    %464 = vmax.xlane.f32.xlu0 %v463
    %v465 = vpop.xlane.xlu0 %464
    %v466 = vsel %vm334, %v461, -inf
    %467 = vmax.xlane.f32.xlu0 %v466
    %v468 = vpop.xlane.xlu0 %467
    %v469 = vsub.f32 %v458, %v465
    %v470 = vsub.f32 %v461, %v468
    %v471 = vmul.f32 %v469, 1.442695
    %v472 = vpow.pop %v471
    %v473 = vmul.f32 %v470, 1.442695
    %v474 = vpow.pop %v473
    %v475 = vsel %vm334, %v472, 0.0
    %476 = vadd.xlane.f32.xlu0 %v475
    %v477 = vpop.xlane.xlu0 %476
    %v478 = vsel %vm334, %v474, 0.0
    %479 = vadd.xlane.f32.xlu0 %v478
    %v480 = vpop.xlane.xlu0 %479
    %v481 = vrcp.pop %v477
    %v482 = vmul.f32 %v477, %v481
    %v483 = vsub.f32 1.0, %v482
    %v484 = vmul.f32 %v481, %v483
    %v485 = vadd.f32 %v481, %v484
    %vm486 = vweird.f32 %v477
    %vm487 = vweird.f32 %v481
    %vm488 = vmor %vm486, %vm487
    %v489 = vsel %vm488, %v481, %v485
    %v490 = vand.u32 2147483647, %v477
    %vm491 = vcmp.eq.f32.partialorder %v490, 8.507059e+37
    %v492 = vand.u32 %v477, 2147483648
    %v493 = vor.u32 1.1754944e-38, %v492
    %v494 = vsel %vm491, %v493, %v489
    %v495 = vmul.f32 %v472, %v494
    %v496 = vrcp.pop %v480
    %v497 = vmul.f32 %v480, %v496
    %v498 = vsub.f32 1.0, %v497
    %v499 = vmul.f32 %v496, %v498
    %v500 = vadd.f32 %v496, %v499
    %vm501 = vweird.f32 %v480
    %vm502 = vweird.f32 %v496
    %vm503 = vmor %vm501, %vm502
    %v504 = vsel %vm503, %v496, %v500
    %v505 = vand.u32 2147483647, %v480
    %vm506 = vcmp.eq.f32.partialorder %v505, 8.507059e+37
    %v507 = vand.u32 %v480, 2147483648
    %v508 = vor.u32 1.1754944e-38, %v507
    %v509 = vsel %vm506, %v508, %v504
    %v510 = vmul.f32 %v474, %v509
    %513 = vrot.lane.b32.xlu0 %v422, 56
    %v514 = vpop.permute.xlu0 %513
    %515 = vrot.lane.b32.xlu0 %v423, 56
    %v516 = vpop.permute.xlu0 %515
    %v520 = vsel %vm334, %v495, 0
    %v523 = vsel %vm334, %v510, 0
    %525 = vmatpush.msra.mxu0 0.0
    %526 = vmatpush.msra.mxu0 0.0
    %527 = vmatpush.msra.mxu0 0.0
    %528 = vmatpush.msra.mxu0 0.0
    %529 = vmatpush.msra.mxu0 0.0
    %530 = vmatpush.msra.mxu0 0.0
    %531 = vmatpush.msra.mxu0 0.0
    %532 = vmatpush.msra.mxu0 0.0
    %533 = vmatpush.msra.mxu0 0.0
    %534 = vmatpush.msra.mxu0 0.0
    %535 = vmatpush.msra.mxu0 0.0
    %536 = vmatpush.msra.mxu0 0.0
    %537 = vmatpush.msra.mxu0 0.0
    %538 = vmatpush.msra.mxu0 0.0
    %539 = vmatpush.msra.mxu0 %v516
    %540 = vmatpush.msra.mxu0 %v514
    %541 = vmatmul.f32.gmra.mxu0 %v520
    %v542 = vpop.f32.mrf.mxu0
    %v543 = vadd.f32 0.0, %v542
    %544 = vmatmul.f32.gmra.mxu0 %v523
    %v545 = vpop.f32.mrf.mxu0
    %v546 = vadd.f32 0.0, %v545
    %547 = vdwg.mxu0
    %s548 = sld [smem:[#allocation8 + $0x2]]
    %v549 = vstv %s548
    %v550 = vmul.f32 %v279, %v549
    %v551 = vmul.f32 %v282, %v549
    %552 = vrot.lane.b32.xlu0 %v279, 112
    %v553 = vpop.permute.xlu0 %552
    %554 = vrot.lane.b32.xlu0 %v282, 112
    %v555 = vpop.permute.xlu0 %554
    %556 = vrot.lane.b32.xlu0 %v279, 80
    %v557 = vpop.permute.xlu0 %556
    %558 = vrot.lane.b32.xlu0 %v282, 80
    %v559 = vpop.permute.xlu0 %558
    %v560 = vsel %vm286, %v553, 0
    %v562 = vsel %vm286, %v555, 0
    %v564 = vsel %vm286, %v557, 0
    %v566 = vsel %vm286, %v559, 0
    %568 = vmatpush.xpose.msra.mxu0 0.0
    %569 = vmatpush.xpose.msra.mxu0 0.0
    %570 = vmatpush.xpose.msra.mxu0 0.0
    %571 = vmatpush.xpose.msra.mxu0 0.0
    %572 = vmatpush.xpose.msra.mxu0 0.0
    %573 = vmatpush.xpose.msra.mxu0 0.0
    %574 = vmatpush.xpose.msra.mxu0 0.0
    %575 = vmatpush.xpose.msra.mxu0 0.0
    %576 = vmatpush.xpose.msra.mxu0 0.0
    %577 = vmatpush.xpose.msra.mxu0 0.0
    %578 = vmatpush.xpose.msra.mxu0 0.0
    %579 = vmatpush.xpose.msra.mxu0 0.0
    %580 = vmatpush.xpose.msra.mxu0 0.0
    %581 = vmatpush.xpose.msra.mxu0 0.0
    %582 = vmatpush.xpose.msra.mxu0 %v566
    %583 = vmatpush.xpose.msra.mxu0 %v564
    %584 = vmatmul.f32.gmra.mxu0 %v560
    %v585 = vpop.f32.mrf.mxu0
    %v586 = vadd.f32 %v287, %v585
    %587 = vmatmul.f32.gmra.mxu0 %v562
    %v588 = vpop.f32.mrf.mxu0
    %v589 = vadd.f32 %v292, %v588
    %590 = vdwg.mxu0
    %v591 = vsel %vm334, %v586, -inf
    %592 = vmax.xlane.f32.xlu0 %v591
    %v593 = vpop.xlane.xlu0 %592
    %v594 = vsel %vm334, %v589, -inf
    %595 = vmax.xlane.f32.xlu0 %v594
    %v596 = vpop.xlane.xlu0 %595
    %v597 = vsub.f32 %v586, %v593
    %v598 = vsub.f32 %v589, %v596
    %v599 = vmul.f32 %v597, 1.442695
    %v600 = vpow.pop %v599
    %v601 = vmul.f32 %v598, 1.442695
    %v602 = vpow.pop %v601
    %v603 = vsel %vm334, %v600, 0.0
    %604 = vadd.xlane.f32.xlu0 %v603
    %v605 = vpop.xlane.xlu0 %604
    %v606 = vsel %vm334, %v602, 0.0
    %607 = vadd.xlane.f32.xlu0 %v606
    %v608 = vpop.xlane.xlu0 %607
    %v609 = vrcp.pop %v605
    %v610 = vmul.f32 %v605, %v609
    %v611 = vsub.f32 1.0, %v610
    %v612 = vmul.f32 %v609, %v611
    %v613 = vadd.f32 %v609, %v612
    %vm614 = vweird.f32 %v605
    %vm615 = vweird.f32 %v609
    %vm616 = vmor %vm614, %vm615
    %v617 = vsel %vm616, %v609, %v613
    %v618 = vand.u32 2147483647, %v605
    %vm619 = vcmp.eq.f32.partialorder %v618, 8.507059e+37
    %v620 = vand.u32 %v605, 2147483648
    %v621 = vor.u32 1.1754944e-38, %v620
    %v622 = vsel %vm619, %v621, %v617
    %v623 = vmul.f32 %v600, %v622
    %v624 = vrcp.pop %v608
    %v625 = vmul.f32 %v608, %v624
    %v626 = vsub.f32 1.0, %v625
    %v627 = vmul.f32 %v624, %v626
    %v628 = vadd.f32 %v624, %v627
    %vm629 = vweird.f32 %v608
    %vm630 = vweird.f32 %v624
    %vm631 = vmor %vm629, %vm630
    %v632 = vsel %vm631, %v624, %v628
    %v633 = vand.u32 2147483647, %v608
    %vm634 = vcmp.eq.f32.partialorder %v633, 8.507059e+37
    %v635 = vand.u32 %v608, 2147483648
    %v636 = vor.u32 1.1754944e-38, %v635
    %v637 = vsel %vm634, %v636, %v632
    %v638 = vmul.f32 %v602, %v637
    %641 = vrot.lane.b32.xlu0 %v550, 48
    %v642 = vpop.permute.xlu0 %641
    %643 = vrot.lane.b32.xlu0 %v551, 48
    %v644 = vpop.permute.xlu0 %643
    %v648 = vsel %vm334, %v623, 0
    %v651 = vsel %vm334, %v638, 0
    %653 = vmatpush.msra.mxu0 0.0
    %654 = vmatpush.msra.mxu0 0.0
    %655 = vmatpush.msra.mxu0 0.0
    %656 = vmatpush.msra.mxu0 0.0
    %657 = vmatpush.msra.mxu0 0.0
    %658 = vmatpush.msra.mxu0 0.0
    %659 = vmatpush.msra.mxu0 0.0
    %660 = vmatpush.msra.mxu0 0.0
    %661 = vmatpush.msra.mxu0 0.0
    %662 = vmatpush.msra.mxu0 0.0
    %663 = vmatpush.msra.mxu0 0.0
    %664 = vmatpush.msra.mxu0 0.0
    %665 = vmatpush.msra.mxu0 0.0
    %666 = vmatpush.msra.mxu0 0.0
    %667 = vmatpush.msra.mxu0 %v644
    %668 = vmatpush.msra.mxu0 %v642
    %669 = vmatmul.f32.gmra.mxu0 %v648
    %v670 = vpop.f32.mrf.mxu0
    %v671 = vadd.f32 0.0, %v670
    %672 = vmatmul.f32.gmra.mxu0 %v651
    %v673 = vpop.f32.mrf.mxu0
    %v674 = vadd.f32 0.0, %v673
    %675 = vdwg.mxu0
    %s676 = sld [smem:[#allocation8 + $0x3]]
    %v677 = vstv %s676
    %v678 = vmul.f32 %v279, %v677
    %v679 = vmul.f32 %v282, %v677
    %680 = vrot.lane.b32.xlu0 %v279, 104
    %v681 = vpop.permute.xlu0 %680
    %682 = vrot.lane.b32.xlu0 %v282, 104
    %v683 = vpop.permute.xlu0 %682
    %684 = vrot.lane.b32.xlu0 %v279, 72
    %v685 = vpop.permute.xlu0 %684
    %686 = vrot.lane.b32.xlu0 %v282, 72
    %v687 = vpop.permute.xlu0 %686
    %v688 = vsel %vm286, %v681, 0
    %v690 = vsel %vm286, %v683, 0
    %v692 = vsel %vm286, %v685, 0
    %v694 = vsel %vm286, %v687, 0
    %696 = vmatpush.xpose.msra.mxu0 0.0
    %697 = vmatpush.xpose.msra.mxu0 0.0
    %698 = vmatpush.xpose.msra.mxu0 0.0
    %699 = vmatpush.xpose.msra.mxu0 0.0
    %700 = vmatpush.xpose.msra.mxu0 0.0
    %701 = vmatpush.xpose.msra.mxu0 0.0
    %702 = vmatpush.xpose.msra.mxu0 0.0
    %703 = vmatpush.xpose.msra.mxu0 0.0
    %704 = vmatpush.xpose.msra.mxu0 0.0
    %705 = vmatpush.xpose.msra.mxu0 0.0
    %706 = vmatpush.xpose.msra.mxu0 0.0
    %707 = vmatpush.xpose.msra.mxu0 0.0
    %708 = vmatpush.xpose.msra.mxu0 0.0
    %709 = vmatpush.xpose.msra.mxu0 0.0
    %710 = vmatpush.xpose.msra.mxu0 %v694
    %711 = vmatpush.xpose.msra.mxu0 %v692
    %712 = vmatmul.f32.gmra.mxu0 %v688
    %v713 = vpop.f32.mrf.mxu0
    %v714 = vadd.f32 %v287, %v713
    %715 = vmatmul.f32.gmra.mxu0 %v690
    %v716 = vpop.f32.mrf.mxu0
    %v717 = vadd.f32 %v292, %v716
    %718 = vdwg.mxu0
    %v719 = vsel %vm334, %v714, -inf
    %720 = vmax.xlane.f32.xlu0 %v719
    %v721 = vpop.xlane.xlu0 %720
    %v722 = vsel %vm334, %v717, -inf
    %723 = vmax.xlane.f32.xlu0 %v722
    %v724 = vpop.xlane.xlu0 %723
    %v725 = vsub.f32 %v714, %v721
    %v726 = vsub.f32 %v717, %v724
    %v727 = vmul.f32 %v725, 1.442695
    %v728 = vpow.pop %v727
    %v729 = vmul.f32 %v726, 1.442695
    %v730 = vpow.pop %v729
    %v731 = vsel %vm334, %v728, 0.0
    %732 = vadd.xlane.f32.xlu0 %v731
    %v733 = vpop.xlane.xlu0 %732
    %v734 = vsel %vm334, %v730, 0.0
    %735 = vadd.xlane.f32.xlu0 %v734
    %v736 = vpop.xlane.xlu0 %735
    %v737 = vrcp.pop %v733
    %v738 = vmul.f32 %v733, %v737
    %v739 = vsub.f32 1.0, %v738
    %v740 = vmul.f32 %v737, %v739
    %v741 = vadd.f32 %v737, %v740
    %vm742 = vweird.f32 %v733
    %vm743 = vweird.f32 %v737
    %vm744 = vmor %vm742, %vm743
    %v745 = vsel %vm744, %v737, %v741
    %v746 = vand.u32 2147483647, %v733
    %vm747 = vcmp.eq.f32.partialorder %v746, 8.507059e+37
    %v748 = vand.u32 %v733, 2147483648
    %v749 = vor.u32 1.1754944e-38, %v748
    %v750 = vsel %vm747, %v749, %v745
    %v751 = vmul.f32 %v728, %v750
    %v752 = vrcp.pop %v736
    %v753 = vmul.f32 %v736, %v752
    %v754 = vsub.f32 1.0, %v753
    %v755 = vmul.f32 %v752, %v754
    %v756 = vadd.f32 %v752, %v755
    %vm757 = vweird.f32 %v736
    %vm758 = vweird.f32 %v752
    %vm759 = vmor %vm757, %vm758
    %v760 = vsel %vm759, %v752, %v756
    %v761 = vand.u32 2147483647, %v736
    %vm762 = vcmp.eq.f32.partialorder %v761, 8.507059e+37
    %v763 = vand.u32 %v736, 2147483648
    %v764 = vor.u32 1.1754944e-38, %v763
    %v765 = vsel %vm762, %v764, %v760
    %v766 = vmul.f32 %v730, %v765
    %769 = vrot.lane.b32.xlu0 %v678, 40
    %v770 = vpop.permute.xlu0 %769
    %771 = vrot.lane.b32.xlu0 %v679, 40
    %v772 = vpop.permute.xlu0 %771
    %v776 = vsel %vm334, %v751, 0
    %v779 = vsel %vm334, %v766, 0
    %781 = vmatpush.msra.mxu0 0.0
    %782 = vmatpush.msra.mxu0 0.0
    %783 = vmatpush.msra.mxu0 0.0
    %784 = vmatpush.msra.mxu0 0.0
    %785 = vmatpush.msra.mxu0 0.0
    %786 = vmatpush.msra.mxu0 0.0
    %787 = vmatpush.msra.mxu0 0.0
    %788 = vmatpush.msra.mxu0 0.0
    %789 = vmatpush.msra.mxu0 0.0
    %790 = vmatpush.msra.mxu0 0.0
    %791 = vmatpush.msra.mxu0 0.0
    %792 = vmatpush.msra.mxu0 0.0
    %793 = vmatpush.msra.mxu0 0.0
    %794 = vmatpush.msra.mxu0 0.0
    %795 = vmatpush.msra.mxu0 %v772
    %796 = vmatpush.msra.mxu0 %v770
    %797 = vmatmul.f32.gmra.mxu0 %v776
    %v798 = vpop.f32.mrf.mxu0
    %v799 = vadd.f32 0.0, %v798
    %800 = vmatmul.f32.gmra.mxu0 %v779
    %v801 = vpop.f32.mrf.mxu0
    %v802 = vadd.f32 0.0, %v801
    %803 = vdwg.mxu0
    %806 = vrot.lane.b32.xlu0 %v543, 8
    %v807 = vpop.permute.xlu0 %806
    %808 = vrot.lane.b32.xlu0 %v546, 8
    %v809 = vpop.permute.xlu0 %808
    %814 = vrot.lane.b32.xlu0 %v671, 16
    %v815 = vpop.permute.xlu0 %814
    %816 = vrot.lane.b32.xlu0 %v674, 16
    %v817 = vpop.permute.xlu0 %816
    %822 = vrot.lane.b32.xlu0 %v799, 24
    %v823 = vpop.permute.xlu0 %822
    %824 = vrot.lane.b32.xlu0 %v802, 24
    %v825 = vpop.permute.xlu0 %824
    %v828 = vsel %vm286, %v415, %v807
    %v829 = vsel %vm286, %v418, %v809
    %v830 = vsel %vm334, %v828, %v815
    %v831 = vsel %vm334, %v829, %v817
    %vm832 = vcmask 195584
    %v833 = vsel %vm832, %v830, %v823
    %v834 = vsel %vm832, %v831, %v825
    %v835 = vld [vmem:[%s6] sm:$0xff]
    %v836 = vld [vmem:[%s6 + $0x8] sm:$0xff]
    %v837 = vld [vmem:[%s6 + $0x10] sm:$0xff]
    %v838 = vld [vmem:[%s6 + $0x18] sm:$0xff]
    %v839 = vperm.slane %v123, 1
    %v841 = vsel %vm254, %v833, 0
    %v844 = vsel %vm254, %v834, 0
    %846 = vmatpush.msra.mxu0 0.0
    %847 = vmatpush.msra.mxu0 0.0
    %848 = vmatpush.msra.mxu0 0.0
    %849 = vmatpush.msra.mxu0 0.0
    %850 = vmatpush.msra.mxu0 0.0
    %851 = vmatpush.msra.mxu0 0.0
    %852 = vmatpush.msra.mxu0 0.0
    %853 = vmatpush.msra.mxu0 0.0
    %854 = vmatpush.msra.mxu0 0.0
    %855 = vmatpush.msra.mxu0 0.0
    %856 = vmatpush.msra.mxu0 0.0
    %857 = vmatpush.msra.mxu0 0.0
    %858 = vmatpush.msra.mxu0 %v838
    %859 = vmatpush.msra.mxu0 %v837
    %860 = vmatpush.msra.mxu0 %v836
    %861 = vmatpush.msra.mxu0 %v835
    %862 = vmatmul.f32.gmra.mxu0 %v841
    %v863 = vpop.f32.mrf.mxu0
    %v864 = vadd.f32 %v839, %v863
    %865 = vmatmul.f32.gmra.mxu0 %v844
    %v866 = vpop.f32.mrf.mxu0
    %v867 = vadd.f32 %v839, %v866
    %868 = vdwg.mxu0
    %v869 = vadd.f32 %v244, %v864
    %v870 = vadd.f32 %v245, %v867
    %v871 = vsel %vm254, %v869, 0.0
    %872 = vadd.xlane.f32.xlu0 %v871
    %v873 = vpop.xlane.xlu0 %872
    %v874 = vsel %vm254, %v870, 0.0
    %875 = vadd.xlane.f32.xlu0 %v874
    %v876 = vpop.xlane.xlu0 %875
    %v877 = vrcp.pop 32.0
    %v878 = vmul.f32 32.0, %v877
    %v879 = vsub.f32 1.0, %v878
    %v880 = vmul.f32 %v877, %v879
    %v881 = vadd.f32 %v877, %v880
    %vm882 = vweird.f32 %v877
    %v883 = vsel %vm882, %v877, %v881
    %v884 = vmul.f32 %v873, %v883
    %v885 = vmul.f32 %v876, %v883
    %v886 = vsub.f32 %v869, %v884
    %v887 = vsub.f32 %v870, %v885
    %v888 = vmul.f32 %v886, %v886
    %v889 = vmul.f32 %v887, %v887
    %v890 = vsel %vm254, %v888, 0.0
    %891 = vadd.xlane.f32.xlu0 %v890
    %v892 = vpop.xlane.xlu0 %891
    %v893 = vsel %vm254, %v889, 0.0
    %894 = vadd.xlane.f32.xlu0 %v893
    %v895 = vpop.xlane.xlu0 %894
    %v896 = vmul.f32 %v892, %v883
    %v897 = vmul.f32 %v895, %v883
    %v898 = vadd.f32 %v896, 1e-05
    %v899 = vadd.f32 %v897, 1e-05
    %v900 = vrsqrt.pop %v898
    %v901 = vmul.f32 %v900, %v898
    %v902 = vmul.f32 %v901, %v900
    %v903 = vmul.f32 0.5, %v902
    %v904 = vsub.f32 1.5, %v903
    %v905 = vmul.f32 %v900, %v904
    %vm906 = vweird.f32 %v898
    %vm907 = vweird.f32 %v900
    %vm908 = vmor %vm906, %vm907
    %v909 = vsel %vm908, %v900, %v905
    %v910 = vrsqrt.pop %v899
    %v911 = vmul.f32 %v910, %v899
    %v912 = vmul.f32 %v911, %v910
    %v913 = vmul.f32 0.5, %v912
    %v914 = vsub.f32 1.5, %v913
    %v915 = vmul.f32 %v910, %v914
    %vm916 = vweird.f32 %v899
    %vm917 = vweird.f32 %v910
    %vm918 = vmor %vm916, %vm917
    %v919 = vsel %vm918, %v910, %v915
    %v920 = vmul.f32 %v886, %v909
    %v921 = vmul.f32 %v887, %v919
    %v922 = vperm.slane %v123, 2
    %v923 = vmul.f32 %v920, %v922
    %v924 = vmul.f32 %v921, %v922
    %v925 = vperm.slane %v123, 3
    %v926 = vadd.f32 %v923, %v925
    %v927 = vadd.f32 %v924, %v925
    %v928 = vld [vmem:[%s7] sm:$0xff]
    %v929 = vld [vmem:[%s7 + $0x8] sm:$0xff]
    %v930 = vld [vmem:[%s7 + $0x10] sm:$0xff]
    %v931 = vld [vmem:[%s7 + $0x18] sm:$0xff]
    %v932 = vperm.slane %v124, 0
    %v934 = vsel %vm254, %v926, 0
    %v937 = vsel %vm254, %v927, 0
    %939 = vmatpush.msra.mxu0 0.0
    %940 = vmatpush.msra.mxu0 0.0
    %941 = vmatpush.msra.mxu0 0.0
    %942 = vmatpush.msra.mxu0 0.0
    %943 = vmatpush.msra.mxu0 0.0
    %944 = vmatpush.msra.mxu0 0.0
    %945 = vmatpush.msra.mxu0 0.0
    %946 = vmatpush.msra.mxu0 0.0
    %947 = vmatpush.msra.mxu0 0.0
    %948 = vmatpush.msra.mxu0 0.0
    %949 = vmatpush.msra.mxu0 0.0
    %950 = vmatpush.msra.mxu0 0.0
    %951 = vmatpush.msra.mxu0 %v931
    %952 = vmatpush.msra.mxu0 %v930
    %953 = vmatpush.msra.mxu0 %v929
    %954 = vmatpush.msra.mxu0 %v928
    %955 = vmatmul.f32.gmra.mxu0 %v934
    %v956 = vpop.f32.mrf.mxu0
    %v957 = vadd.f32 %v932, %v956
    %958 = vmatmul.f32.gmra.mxu0 %v937
    %v959 = vpop.f32.mrf.mxu0
    %v960 = vadd.f32 %v932, %v959
    %961 = vdwg.mxu0
    %v962 = vsel %vm134, %v957, 0.0
    %963 = vadd.xlane.f32.xlu0 %v962
    %v964 = vpop.xlane.xlu0 %963
    %v965 = vsel %vm134, %v960, 0.0
    %966 = vadd.xlane.f32.xlu0 %v965
    %v967 = vpop.xlane.xlu0 %966
    %v968 = vrcp.pop 64.0
    %v969 = vmul.f32 64.0, %v968
    %v970 = vsub.f32 1.0, %v969
    %v971 = vmul.f32 %v968, %v970
    %v972 = vadd.f32 %v968, %v971
    %vm973 = vweird.f32 %v968
    %v974 = vsel %vm973, %v968, %v972
    %v975 = vmul.f32 %v964, %v974
    %v976 = vmul.f32 %v967, %v974
    %v977 = vsub.f32 %v957, %v975
    %v978 = vsub.f32 %v960, %v976
    %v979 = vmul.f32 %v977, %v977
    %v980 = vmul.f32 %v978, %v978
    %v981 = vsel %vm134, %v979, 0.0
    %982 = vadd.xlane.f32.xlu0 %v981
    %v983 = vpop.xlane.xlu0 %982
    %v984 = vsel %vm134, %v980, 0.0
    %985 = vadd.xlane.f32.xlu0 %v984
    %v986 = vpop.xlane.xlu0 %985
    %v987 = vmul.f32 %v983, %v974
    %v988 = vmul.f32 %v986, %v974
    %v989 = vadd.f32 %v987, 1e-05
    %v990 = vadd.f32 %v988, 1e-05
    %v991 = vrsqrt.pop %v989
    %v992 = vmul.f32 %v991, %v989
    %v993 = vmul.f32 %v992, %v991
    %v994 = vmul.f32 0.5, %v993
    %v995 = vsub.f32 1.5, %v994
    %v996 = vmul.f32 %v991, %v995
    %vm997 = vweird.f32 %v989
    %vm998 = vweird.f32 %v991
    %vm999 = vmor %vm997, %vm998
    %v1000 = vsel %vm999, %v991, %v996
    %v1001 = vrsqrt.pop %v990
    %v1002 = vmul.f32 %v1001, %v990
    %v1003 = vmul.f32 %v1002, %v1001
    %v1004 = vmul.f32 0.5, %v1003
    %v1005 = vsub.f32 1.5, %v1004
    %v1006 = vmul.f32 %v1001, %v1005
    %vm1007 = vweird.f32 %v990
    %vm1008 = vweird.f32 %v1001
    %vm1009 = vmor %vm1007, %vm1008
    %v1010 = vsel %vm1009, %v1001, %v1006
    %v1011 = vmul.f32 %v977, %v1000
    %v1012 = vmul.f32 %v978, %v1010
    %v1013 = vperm.slane %v124, 1
    %v1014 = vmul.f32 %v1011, %v1013
    %v1015 = vmul.f32 %v1012, %v1013
    %v1016 = vperm.slane %v124, 2
    %v1017 = vadd.f32 %v1014, %v1016
    %v1018 = vadd.f32 %v1015, %v1016
    %1019 = vst.msk [vmem:[#allocation13] sm:$0xff] %vm134, %v1017
    %1020 = vst.msk [vmem:[#allocation13 + $0x8] sm:$0xff] %vm134, %v1018
    // Predicated region
    $region66: #{plugin_forward.1} parent=1 // pred_check
      _
    $region67: #{plugin_forward.1} parent=1 // pred_check_branch
      %1022 = sbr.rel (0) target = $region69
    $region68: #{plugin_forward.1} parent=1 // pred_region
      %1024 = vsyncadd [#allocation4], 0
      %s1025 = sshll.u32 [#allocation13], 4
      %s1026 = int_to_ptr.vmem [resolvable:$true] %s1025
      %s1027 = sshll.u32 %s10, 4
      %s1028 = int_to_ptr.hbm [resolvable:$true] %s1027
      %1033 = dma.vmem_to_hbm [thread:$0]  %s1026, 256, %s1028, [#allocation4], 128, 128, 8
    $region69: #{plugin_forward.1} parent=1 // pred_fallthru
      _
    // Predicated region
    $region70: #{plugin_forward.1} parent=1 // pred_check
      _
    $region71: #{plugin_forward.1} parent=1 // pred_check_branch
      %1035 = sbr.rel (0) target = $region73
    $region72: #{plugin_forward.1} parent=1 // pred_region
      %1037 = dma.done [#allocation4], 256
    $region73: #{plugin_forward.1} parent=1 // pred_fallthru
      _
    %1038 = vsyncpa [#allocation3], 1
    %1039 = vsyncpa [#allocation7], 1
    %1040 = vsyncpa [#allocation11], 1
    %1041 = vsyncpa [#allocation4], 1
    %1042 = vsyncpa [#allocation5], 1

</llo_original>
